<compile_context>
chip_gen: v7x
topology: tpu7x:2x2x1
jax: 0.10.0
libtpu: 0.0.40
codegen_flags: <defaults>
</compile_context>

<pallas_src>
import re
import numpy as np
import jax
import jax.numpy as jnp
from jax.experimental import pallas as pl
from jax.experimental.pallas import tpu as pltpu


def _round_up(n, m):
    return ((n + m - 1) // m) * m


def _tpu_generation():
    """Best-effort TPU generation (5, 6, 7, ...) parsed from the device kind string."""
    try:
        kind = jax.devices()[0].device_kind
    except Exception:
        return 0
    m = re.search(r"(\d+)", kind)
    return int(m.group(1)) if m else 0


def _block_diag(w, pack):
    """Expand (din, dout) -> block-diagonal (pack*din, pack*dout)."""
    if pack == 1:
        return w
    din, dout = w.shape
    eye = jnp.eye(pack, dtype=w.dtype)
    w4 = eye[:, None, :, None] * w[None, :, None, :]      # (pack, din, pack, dout)
    return w4.reshape(pack * din, pack * dout)


def _mlp_kernel(x_ref, w1_ref, b1_ref, w2_ref, b2_ref, o_ref):
    # Layer 1: Linear + ReLU.  MXU inputs use the weights' dtype (bf16 fast path casts the
    # freshly loaded tile in-kernel — no extra HBM pass); accumulation is always f32.
    a = x_ref[...].astype(w1_ref.dtype)
    h = jnp.dot(a, w1_ref[...], preferred_element_type=jnp.float32)
    h = jnp.maximum(h + b1_ref[...], 0.0)
    # Layer 2: Linear + Sigmoid.  Epilogue stays f32 on the accumulator.
    y = jnp.dot(h.astype(w2_ref.dtype), w2_ref[...], preferred_element_type=jnp.float32)
    y = jax.nn.sigmoid(y + b2_ref[...])
    o_ref[...] = y.astype(o_ref.dtype)


def pure_network_forward(x, w1, b1, w2, b2, *, block_rows=8192,
                         compute_dtype="auto", out_dtype=None):
    """Fused PureNetwork forward: sigmoid(relu(x @ w1 + b1) @ w2 + b2).

    x : (B, D_in);  w1: (D_in, H1);  b1: (1, H1);  w2: (H1, H2);  b2: (1, H2).

    block_rows   : target original-rows per grid step (fixed, batch-size independent).
    compute_dtype: MXU-input dtype.  "auto" -> bf16 on v7x, f32 otherwise; None -> f32.
                   x is never cast in the wrapper; the kernel casts tiles after loading.
                   NOTE: sub-f32 compute gives ~bf16-accurate outputs (fine for sigmoids).
    out_dtype    : output store dtype (default f32 to match the PyTorch module).
    """
    B, D_in = x.shape
    H1 = w1.shape[1]
    H2 = w2.shape[1]

    gen = _tpu_generation()
    if isinstance(compute_dtype, str):            # "auto"
        compute_dtype = jnp.bfloat16 if gen >= 7 else jnp.float32
    if compute_dtype is None:
        compute_dtype = jnp.float32
    out_dtype = jnp.float32 if out_dtype is None else out_dtype

    x_size = np.dtype(x.dtype).itemsize
    w_size = np.dtype(compute_dtype).itemsize
    o_size = np.dtype(out_dtype).itemsize

    w1 = w1.astype(compute_dtype)
    w2 = w2.astype(compute_dtype)
    b1 = b1.astype(jnp.float32).reshape(1, H1)
    b2 = b2.astype(jnp.float32).reshape(1, H2)

    # ---- lane-dense folding -------------------------------------------------
    # H2 < 128 would make every output store a masked partial-lane vst.  Fold `pack`
    # consecutive batch rows into the lane axis (free row-major reshape in HBM) and
    # expand the weights block-diagonally (pack**2 blow-up is tiny / VMEM-resident).
    pack = 1
    if H2 < 128 and 128 % H2 == 0:
        cand = 128 // H2
        if cand > 1 and (D_in * H1 + H1 * H2) * cand * cand * w_size <= 8 * 1024 * 1024:
            pack = cand
    Df, H1f, H2f = pack * D_in, pack * H1, pack * H2

    # ---- generation-aware VMEM budget ----------------------------------------
    # v5e/v6e: 128 MiB physical VMEM -> raise the scoped limit well above the 16/32 MiB
    # defaults.  v7x: 64 MiB per TC and both TCs' pipeline buffers coexist when the grid
    # is core-sharded -> stay conservative.
    vmem_limit = (32 if (gen >= 7 or gen == 0) else 64) * 1024 * 1024
    budget = vmem_limit - 8 * 1024 * 1024          # headroom for Mosaic internal scratch

    lane = lambda n: max(_round_up(n, 128), 128)   # feature dims pad to 128 lanes
    # VMEM bytes per folded batch row: double-buffered streams + live intermediates.
    bytes_per_frow = (
        2 * lane(Df) * x_size                              # x tile (double-buffered)
        + lane(Df) * w_size                                # x cast to compute dtype
        + lane(H1f) * 4                                    # h, f32 layer-1 accumulator
        + (lane(H1f) * w_size if w_size < 4 else 0)        # h cast copy (bf16 path)
        + lane(H2f) * 4                                    # y, f32 layer-2 accumulator
        + 2 * lane(H2f) * o_size)                          # out tile (double-buffered)
    # Weights/biases are constant-index inputs; counted double-buffered (pipeline default).
    w_resident = 2 * ((Df * H1f + H1f * H2f) * w_size + (H1f + H2f) * 4)

    # ---- batch tiling (folded-row units) --------------------------------------
    row_align = 16 if min(x_size, w_size, o_size) < 4 else 8
    if w_resident + row_align * bytes_per_frow > budget:
        # TODO(synk): add a K-tiled fallback for layers whose weights exceed the VMEM budget.
        raise ValueError("PureNetwork weights too large to keep resident in VMEM")

    max_frows = (budget - w_resident) // bytes_per_frow
    tf = max(row_align, min(block_rows // pack, max_frows))
    tf = (tf // row_align) * row_align
    need = -(-B // pack)                                   # folded rows of real data
    # Shrink tf only by powers of two for small batches: avoids padding a tiny batch up to
    # a huge tile while keeping the set of compiled block shapes small (B-independent).
    while tf > row_align and need <= tf // 2:
        tf //= 2
    tf = max(row_align, (tf // row_align) * row_align)
    steps = -(-need // tf)
    # Prefer >=2 grid steps whenever there is enough work to split: gives prefetch/compute
    # overlap and lets v7x shard the ("parallel",) batch axis across its 2 TensorCores.
    if steps == 1 and need > row_align:
        tf = max(row_align, ((tf // 2) // row_align) * row_align)
        steps = -(-need // tf)
    frows = steps * tf
    B_pad = frows * pack

    if B_pad != B:
        x = jnp.pad(x, ((0, B_pad - B), (0, 0)))

    xf = x.reshape(frows, Df)                              # free row-major fold
    w1f = _block_diag(w1, pack)
    w2f = _block_diag(w2, pack)
    b1f = jnp.tile(b1, (1, pack)) if pack > 1 else b1
    b2f = jnp.tile(b2, (1, pack)) if pack > 1 else b2

    out = pl.pallas_call(
        _mlp_kernel,
        out_shape=jax.ShapeDtypeStruct((frows, H2f), out_dtype),
        grid=(steps,),
        in_specs=[
            pl.BlockSpec((tf, Df), lambda i: (i, 0)),      # x: streamed per batch tile
            pl.BlockSpec((Df, H1f), lambda i: (0, 0)),     # weights / biases: constant
            pl.BlockSpec((1, H1f), lambda i: (0, 0)),      #   index_map -> DMA'd once,
            pl.BlockSpec((H1f, H2f), lambda i: (0, 0)),    #   resident in VMEM
            pl.BlockSpec((1, H2f), lambda i: (0, 0)),
        ],
        out_specs=pl.BlockSpec((tf, H2f), lambda i: (i, 0)),
        compiler_params=pltpu.CompilerParams(
            dimension_semantics=("parallel",),             # batch axis: megacore-shardable
            vmem_limit_bytes=vmem_limit,
        ),
    )(xf, w1f, b1f, w2f, b2f)

    # Unfold (free) and drop batch padding.
    return out.reshape(B_pad, H2)[:B]


def init_pure_network_params(key, encsize, layers):
    """Deterministic init mimicking torch.nn.Linear default:
    U(-1/sqrt(fan_in), 1/sqrt(fan_in)) for both weight and bias."""
    cursize = int(np.prod(encsize))
    params = []
    for lnc in layers:
        key, kw, kb = jax.random.split(key, 3)
        bound = 1.0 / np.sqrt(cursize)
        # stored as (in, out) == transpose of PyTorch's (out, in)
        w = jax.random.uniform(kw, (cursize, lnc), jnp.float32, -bound, bound)
        b = jax.random.uniform(kb, (1, lnc), jnp.float32, -bound, bound)
        params.append((w, b))
        cursize = lnc
    return params


def reference_forward(x, params):
    """Pure-JAX reference (matches PyTorch: relu after layer 0, sigmoid after layer 1)."""
    (w1, b1), (w2, b2) = params
    h = jnp.maximum(x @ w1 + b1, 0.0)
    return jax.nn.sigmoid(h @ w2 + b2)


if __name__ == "__main__":
    # Small shapes consistent with the module: encsize=32 input features,
    # layers=[64, 32], acts=[relu, sigmoid].
    B = 8
    encsize = 32
    layers = [64, 32]

    key = jax.random.PRNGKey(0)
    key, kx = jax.random.split(key)
    x = jax.random.normal(kx, (B, encsize), jnp.float32)

    params = init_pure_network_params(key, encsize, layers)
    (w1, b1), (w2, b2) = params

    # Strict f32 path on a tiny batch.
    out = jax.block_until_ready(
        pure_network_forward(x, w1, b1, w2, b2, compute_dtype=jnp.float32))
    ref = reference_forward(x, params)
    np.testing.assert_allclose(np.asarray(out), np.asarray(ref), rtol=1e-5, atol=1e-5)

    # Larger non-multiple batch with generation-default ("auto") compute dtype:
    # exercises padding, lane folding, and a >=2-step grid (megacore-shardable).
    key, kx2 = jax.random.split(key)
    xb = jax.random.normal(kx2, (1000, encsize), jnp.float32)
    outb = jax.block_until_ready(pure_network_forward(xb, w1, b1, w2, b2))
    refb = reference_forward(xb, params)
    np.testing.assert_allclose(np.asarray(outb), np.asarray(refb), rtol=2e-2, atol=2e-2)

    # Explicit bf16 MXU path with bf16 output stream (mem-bound fast path):
    # f32 accumulation + f32 epilogue, bf16 loads/stores.
    out16 = jax.block_until_ready(
        pure_network_forward(xb, w1, b1, w2, b2,
                             compute_dtype=jnp.bfloat16, out_dtype=jnp.bfloat16))
    assert out16.dtype == jnp.bfloat16
    np.testing.assert_allclose(np.asarray(out16, dtype=np.float32), np.asarray(refb),
                               rtol=2e-2, atol=2e-2)

    print("KERNEL_OK")
</pallas_src>

<mosaic_0001>
module attributes {stable_mosaic.version = 11 : i64} {
  func.func @_mlp_kernel(%arg0: i32, %arg1: memref<8x128xf32, #tpu.memory_space<vmem>>, %arg2: memref<128x256xf32, #tpu.memory_space<vmem>>, %arg3: memref<1x256xf32, #tpu.memory_space<vmem>>, %arg4: memref<256x128xf32, #tpu.memory_space<vmem>>, %arg5: memref<1x128xf32, #tpu.memory_space<vmem>>, %arg6: memref<8x128xf32, #tpu.memory_space<vmem>>) attributes {dimension_semantics = [#tpu.dimension_semantics<parallel>], iteration_bounds = array<i64: 1>, scalar_prefetch = 0 : i64, scratch_operands = 0 : i64, tpu.core_type = #tpu.core_type<tc>, window_params = [{transform_indices = @transform_0, window_bounds = array<i64: 8, 128>}, {pipeline_mode = #tpu.pipeline_mode<synchronous>, transform_indices = @transform_1, window_bounds = array<i64: 128, 256>}, {pipeline_mode = #tpu.pipeline_mode<synchronous>, transform_indices = @transform_2, window_bounds = array<i64: 1, 256>}, {pipeline_mode = #tpu.pipeline_mode<synchronous>, transform_indices = @transform_3, window_bounds = array<i64: 256, 128>}, {pipeline_mode = #tpu.pipeline_mode<synchronous>, transform_indices = @transform_4, window_bounds = array<i64: 1, 128>}, {transform_indices = @transform_5, window_bounds = array<i64: 8, 128>}]} {
    %c0 = arith.constant 0 : index
    %c0_0 = arith.constant 0 : index
    %0 = vector.load %arg1[%c0, %c0_0] : memref<8x128xf32, #tpu.memory_space<vmem>>, vector<8x128xf32>
    %c0_1 = arith.constant 0 : index
    %c0_2 = arith.constant 0 : index
    %1 = vector.load %arg2[%c0_1, %c0_2] : memref<128x256xf32, #tpu.memory_space<vmem>>, vector<128x256xf32>
    %cst = arith.constant dense<0.000000e+00> : vector<8x256xf32>
    %2 = tpu.matmul %0, %1, %cst {dimension_numbers = #tpu.dot_dimension_numbers<[1], [0], [0], [1], [0, 0, 1, 1], [], []>} : vector<8x128xf32>, vector<128x256xf32>, vector<8x256xf32> -> vector<8x256xf32>
    %c0_3 = arith.constant 0 : index
    %c0_4 = arith.constant 0 : index
    %3 = vector.load %arg3[%c0_3, %c0_4] : memref<1x256xf32, #tpu.memory_space<vmem>>, vector<1x256xf32>
    %4 = vector.broadcast %3 : vector<1x256xf32> to vector<8x256xf32>
    %5 = arith.addf %2, %4 : vector<8x256xf32>
    %cst_5 = arith.constant 0.000000e+00 : f32
    %6 = vector.broadcast %cst_5 : f32 to vector<8x256xf32>
    %7 = arith.maximumf %5, %6 : vector<8x256xf32>
    %c0_6 = arith.constant 0 : index
    %c0_7 = arith.constant 0 : index
    %8 = vector.load %arg4[%c0_6, %c0_7] : memref<256x128xf32, #tpu.memory_space<vmem>>, vector<256x128xf32>
    %cst_8 = arith.constant dense<0.000000e+00> : vector<8x128xf32>
    %9 = tpu.matmul %7, %8, %cst_8 {dimension_numbers = #tpu.dot_dimension_numbers<[1], [0], [0], [1], [0, 0, 1, 1], [], []>} : vector<8x256xf32>, vector<256x128xf32>, vector<8x128xf32> -> vector<8x128xf32>
    %c0_9 = arith.constant 0 : index
    %c0_10 = arith.constant 0 : index
    %10 = vector.load %arg5[%c0_9, %c0_10] : memref<1x128xf32, #tpu.memory_space<vmem>>, vector<1x128xf32>
    %11 = vector.broadcast %10 : vector<1x128xf32> to vector<8x128xf32>
    %12 = arith.addf %9, %11 : vector<8x128xf32>
    %13 = arith.negf %12 : vector<8x128xf32>
    %14 = math.exp %13 : vector<8x128xf32>
    %cst_11 = arith.constant 1.000000e+00 : f32
    %15 = vector.broadcast %cst_11 : f32 to vector<8x128xf32>
    %16 = arith.addf %15, %14 : vector<8x128xf32>
    %17 = arith.divf %15, %16 : vector<8x128xf32>
    %c0_12 = arith.constant 0 : index
    %c0_13 = arith.constant 0 : index
    %18 = vector.load %arg6[%c0_12, %c0_13] : memref<8x128xf32, #tpu.memory_space<vmem>>, vector<8x128xf32>
    tpu.vector_store %arg6[%c0_12, %c0_13], %17 {strides = array<i32>} : memref<8x128xf32, #tpu.memory_space<vmem>>, vector<8x128xf32>,
    return
  }
  func.func @transform_0(%arg0: i32) -> (i32, i32) {
    %c0_i32 = arith.constant 0 : i32
    %c0_i32_0 = arith.constant 0 : i32
    return %arg0, %c0_i32 : i32, i32
  }
  func.func @transform_1(%arg0: i32) -> (i32, i32) {
    %c0_i32 = arith.constant 0 : i32
    %c0_i32_0 = arith.constant 0 : i32
    %c0_i32_1 = arith.constant 0 : i32
    return %c0_i32, %c0_i32_0 : i32, i32
  }
  func.func @transform_2(%arg0: i32) -> (i32, i32) {
    %c0_i32 = arith.constant 0 : i32
    %c0_i32_0 = arith.constant 0 : i32
    %c0_i32_1 = arith.constant 0 : i32
    return %c0_i32, %c0_i32_0 : i32, i32
  }
  func.func @transform_3(%arg0: i32) -> (i32, i32) {
    %c0_i32 = arith.constant 0 : i32
    %c0_i32_0 = arith.constant 0 : i32
    %c0_i32_1 = arith.constant 0 : i32
    return %c0_i32, %c0_i32_0 : i32, i32
  }
  func.func @transform_4(%arg0: i32) -> (i32, i32) {
    %c0_i32 = arith.constant 0 : i32
    %c0_i32_0 = arith.constant 0 : i32
    %c0_i32_1 = arith.constant 0 : i32
    return %c0_i32, %c0_i32_0 : i32, i32
  }
  func.func @transform_5(%arg0: i32) -> (i32, i32) {
    %c0_i32 = arith.constant 0 : i32
    %c0_i32_0 = arith.constant 0 : i32
    return %arg0, %c0_i32 : i32, i32
  }
}

</mosaic_0001>

<llo_original>
// kernel: tpu_custom_call.1
$region0: #{tpu_custom_call.1}
  #allocation0 [shape = 'u32[]', space=smem, size = 0x4, offset = 0x4, fixed_abs, tag = 'smem constant byte address 0x4 - core index']
  #allocation1 [shape = 'u32[144,128]{1,0:T(1,128)}', space=vmem, size = 0x12000, scoped, tag = 'internal scratch']
  %s0 = inlined_call_operand.hbm [shape: f32[8,128], index: 0, kind: input, shape index: {}]
  %s1 = inlined_call_operand.hbm [shape: f32[128,256], index: 1, kind: input, shape index: {}]
  %s2 = inlined_call_operand.vmem [shape: f32[1,256], index: 2, kind: input, shape index: {}]
  %s3 = inlined_call_operand.hbm [shape: f32[256,128], index: 3, kind: input, shape index: {}]
  %s4 = inlined_call_operand.vmem [shape: f32[1,128], index: 4, kind: input, shape index: {}]
  %s5 = inlined_call_operand.hbm [shape: f32[8,128], index: 5, kind: output, shape index: {}]
  %s6 = sld [smem:[#allocation0]]
  $region42: #{tpu_custom_call.1} parent=0
    _
  %s8 = ssub.s32 1, %s6
  %s9 = scalar_select 0, %s8, %s6
  $region1: #{tpu_custom_call.1} parent=0
    #allocation2 [shape = 'u8[4096]{0}', space=vmem, size = 0x1000, scoped, tag = 'input window, operand 0, single buffered']
    #allocation3 [shape = 's32[1]{0}', space=sflag, size = 0x4, scoped, tag = 'scoped memory for tpu_custom_call.1']
    #allocation4 [shape = 's32[1]{0}', space=sflag, size = 0x4, scoped, tag = 'scoped memory for tpu_custom_call.1']
    #allocation5 [shape = 'u8[131072]{0}', space=vmem, size = 0x20000, scoped, tag = 'input window, operand 1, single buffered']
    #allocation6 [shape = 's32[1]{0}', space=sflag, size = 0x4, scoped, tag = 'scoped memory for tpu_custom_call.1']
    #allocation7 [shape = 'u8[131072]{0}', space=vmem, size = 0x20000, scoped, tag = 'input window, operand 3, single buffered']
    #allocation8 [shape = 'u8[4096]{0}', space=vmem, size = 0x1000, scoped, tag = 'output window, operand 0, single buffered']
    %10 = vsyncpa [#allocation3], 0
    %11 = vsyncpa [#allocation6], 0
    %12 = vsyncpa [#allocation4], 0
    // Predicated region
    $region2: #{tpu_custom_call.1} parent=1 // pred_check
      _
    $region3: #{tpu_custom_call.1} parent=1 // pred_check_branch
      %14 = sbr.rel (0) target = $region5
    $region4: #{tpu_custom_call.1} parent=1 // pred_region
      %s16 = ssub.s32 128, 128
      %17 = vsyncadd [#allocation3], %s16
      %s19 = sshll.u32 [#allocation2], 4
      %s20 = int_to_ptr.vmem [resolvable:$true] %s19
      %22 = dma.hbm_to_vmem [thread:$0]  %s0, 128, %s20, [#allocation3]
    $region5: #{tpu_custom_call.1} parent=1 // pred_fallthru
      _
    // Predicated region
    $region6: #{tpu_custom_call.1} parent=1 // pred_check
      _
    $region7: #{tpu_custom_call.1} parent=1 // pred_check_branch
      %24 = sbr.rel (0) target = $region9
    $region8: #{tpu_custom_call.1} parent=1 // pred_region
      %s26 = ssub.s32 4096, 4096
      %27 = vsyncadd [#allocation6], %s26
      %s28 = sshll.u32 [#allocation5], 4
      %s29 = int_to_ptr.vmem [resolvable:$true] %s28
      %34 = dma.hbm_to_vmem [thread:$0]  %s1, 4096, %s29, [#allocation6], 256, 256, 16
    $region9: #{tpu_custom_call.1} parent=1 // pred_fallthru
      _
    // Predicated region
    $region10: #{tpu_custom_call.1} parent=1 // pred_check
      _
    $region11: #{tpu_custom_call.1} parent=1 // pred_check_branch
      %36 = sbr.rel (0) target = $region13
    $region12: #{tpu_custom_call.1} parent=1 // pred_region
      _
    $region13: #{tpu_custom_call.1} parent=1 // pred_fallthru
      _
    // Predicated region
    $region14: #{tpu_custom_call.1} parent=1 // pred_check
      _
    $region15: #{tpu_custom_call.1} parent=1 // pred_check_branch
      %38 = sbr.rel (0) target = $region17
    $region16: #{tpu_custom_call.1} parent=1 // pred_region
      %s40 = ssub.s32 4096, 4096
      %41 = vsyncadd [#allocation6], %s40
      %s42 = sshll.u32 [#allocation7], 4
      %s43 = int_to_ptr.vmem [resolvable:$true] %s42
      %48 = dma.hbm_to_vmem [thread:$0]  %s3, 4096, %s43, [#allocation6], 128, 128, 8
    $region17: #{tpu_custom_call.1} parent=1 // pred_fallthru
      _
    // Predicated region
    $region18: #{tpu_custom_call.1} parent=1 // pred_check
      _
    $region19: #{tpu_custom_call.1} parent=1 // pred_check_branch
      %50 = sbr.rel (0) target = $region21
    $region20: #{tpu_custom_call.1} parent=1 // pred_region
      _
    $region21: #{tpu_custom_call.1} parent=1 // pred_fallthru
      _
    // Predicated region
    $region22: #{tpu_custom_call.1} parent=1 // pred_check
      _
    $region23: #{tpu_custom_call.1} parent=1 // pred_check_branch
      %52 = sbr.rel (0) target = $region25
    $region24: #{tpu_custom_call.1} parent=1 // pred_region
      %53 = dma.done [#allocation3], 128
    $region25: #{tpu_custom_call.1} parent=1 // pred_fallthru
      _
    // Predicated region
    $region26: #{tpu_custom_call.1} parent=1 // pred_check
      _
    $region27: #{tpu_custom_call.1} parent=1 // pred_check_branch
      %55 = sbr.rel (0) target = $region29
    $region28: #{tpu_custom_call.1} parent=1 // pred_region
      %56 = dma.done [#allocation6], 4096
    $region29: #{tpu_custom_call.1} parent=1 // pred_fallthru
      _
    // Predicated region
    $region30: #{tpu_custom_call.1} parent=1 // pred_check
      _
    $region31: #{tpu_custom_call.1} parent=1 // pred_check_branch
      %58 = sbr.rel (0) target = $region33
    $region32: #{tpu_custom_call.1} parent=1 // pred_region
      %59 = dma.done [#allocation6], 4096
    $region33: #{tpu_custom_call.1} parent=1 // pred_fallthru
      _
    %v60 = vld [vmem:[#allocation2] sm:$0xff]
    %v61 = vld [vmem:[#allocation5] sm:$0xff]
    %v62 = vld [vmem:[#allocation5 + $0x8] sm:$0xff]
    %v63 = vld [vmem:[#allocation5 + $0x10] sm:$0xff]
    %v64 = vld [vmem:[#allocation5 + $0x18] sm:$0xff]
    %v65 = vld [vmem:[#allocation5 + $0x20] sm:$0xff]
    %v66 = vld [vmem:[#allocation5 + $0x28] sm:$0xff]
    %v67 = vld [vmem:[#allocation5 + $0x30] sm:$0xff]
    %v68 = vld [vmem:[#allocation5 + $0x38] sm:$0xff]
    %v69 = vld [vmem:[#allocation5 + $0x40] sm:$0xff]
    %v70 = vld [vmem:[#allocation5 + $0x48] sm:$0xff]
    %v71 = vld [vmem:[#allocation5 + $0x50] sm:$0xff]
    %v72 = vld [vmem:[#allocation5 + $0x58] sm:$0xff]
    %v73 = vld [vmem:[#allocation5 + $0x60] sm:$0xff]
    %v74 = vld [vmem:[#allocation5 + $0x68] sm:$0xff]
    %v75 = vld [vmem:[#allocation5 + $0x70] sm:$0xff]
    %v76 = vld [vmem:[#allocation5 + $0x78] sm:$0xff]
    %v77 = vld [vmem:[#allocation5 + $0x80] sm:$0xff]
    %v78 = vld [vmem:[#allocation5 + $0x88] sm:$0xff]
    %v79 = vld [vmem:[#allocation5 + $0x90] sm:$0xff]
    %v80 = vld [vmem:[#allocation5 + $0x98] sm:$0xff]
    %v81 = vld [vmem:[#allocation5 + $0xa0] sm:$0xff]
    %v82 = vld [vmem:[#allocation5 + $0xa8] sm:$0xff]
    %v83 = vld [vmem:[#allocation5 + $0xb0] sm:$0xff]
    %v84 = vld [vmem:[#allocation5 + $0xb8] sm:$0xff]
    %v85 = vld [vmem:[#allocation5 + $0xc0] sm:$0xff]
    %v86 = vld [vmem:[#allocation5 + $0xc8] sm:$0xff]
    %v87 = vld [vmem:[#allocation5 + $0xd0] sm:$0xff]
    %v88 = vld [vmem:[#allocation5 + $0xd8] sm:$0xff]
    %v89 = vld [vmem:[#allocation5 + $0xe0] sm:$0xff]
    %v90 = vld [vmem:[#allocation5 + $0xe8] sm:$0xff]
    %v91 = vld [vmem:[#allocation5 + $0xf0] sm:$0xff]
    %v92 = vld [vmem:[#allocation5 + $0xf8] sm:$0xff]
    %v93 = vld [vmem:[%s2] sm:$0x3]
    %v95 = vlaneseq
    %v96 = vshrl.u32 %v95, 7
    %v97 = vsub.s32 0, %v96
    %v98 = vrot.slane %v93, %v97
    %v99 = vlaneseq
    %v100 = vshrl.u32 %v99, 7
    %v101 = vsub.s32 1, %v100
    %v102 = vrot.slane %v93, %v101
    %105 = vmatprep.subr.mxu0 %v62
    %106 = vmatpush1.msra.mxu0 %v61
    %107 = vmatprep.subr.mxu0 %v64
    %108 = vmatpush1.msra.mxu0 %v63
    %109 = vmatprep.subr.mxu0 %v66
    %110 = vmatpush1.msra.mxu0 %v65
    %111 = vmatprep.subr.mxu0 %v68
    %112 = vmatpush1.msra.mxu0 %v67
    %113 = vmatprep.subr.mxu0 %v70
    %114 = vmatpush1.msra.mxu0 %v69
    %115 = vmatprep.subr.mxu0 %v72
    %116 = vmatpush1.msra.mxu0 %v71
    %117 = vmatprep.subr.mxu0 %v74
    %118 = vmatpush1.msra.mxu0 %v73
    %119 = vmatprep.subr.mxu0 %v76
    %120 = vmatpush1.msra.mxu0 %v75
    %121 = vmatprep.subr.mxu0 %v78
    %122 = vmatpush1.msra.mxu0 %v77
    %123 = vmatprep.subr.mxu0 %v80
    %124 = vmatpush1.msra.mxu0 %v79
    %125 = vmatprep.subr.mxu0 %v82
    %126 = vmatpush1.msra.mxu0 %v81
    %127 = vmatprep.subr.mxu0 %v84
    %128 = vmatpush1.msra.mxu0 %v83
    %129 = vmatprep.subr.mxu0 %v86
    %130 = vmatpush1.msra.mxu0 %v85
    %131 = vmatprep.subr.mxu0 %v88
    %132 = vmatpush1.msra.mxu0 %v87
    %133 = vmatprep.subr.mxu0 %v90
    %134 = vmatpush1.msra.mxu0 %v89
    %135 = vmatprep.subr.mxu0 %v92
    %136 = vmatpush1.msra.mxu0 %v91
    %137 = vmatprep.subr.mxu0 0.0
    %138 = vmatpush1.msra.mxu0 0.0
    %139 = vmatprep.subr.mxu0 0.0
    %140 = vmatpush1.msra.mxu0 0.0
    %141 = vmatprep.subr.mxu0 0.0
    %142 = vmatpush1.msra.mxu0 0.0
    %143 = vmatprep.subr.mxu0 0.0
    %144 = vmatpush1.msra.mxu0 0.0
    %145 = vmatprep.subr.mxu0 0.0
    %146 = vmatpush1.msra.mxu0 0.0
    %147 = vmatprep.subr.mxu0 0.0
    %148 = vmatpush1.msra.mxu0 0.0
    %149 = vmatprep.subr.mxu0 0.0
    %150 = vmatpush1.msra.mxu0 0.0
    %151 = vmatprep.subr.mxu0 0.0
    %152 = vmatpush1.msra.mxu0 0.0
    %153 = vmatprep.subr.mxu0 0.0
    %154 = vmatpush1.msra.mxu0 0.0
    %155 = vmatprep.subr.mxu0 0.0
    %156 = vmatpush1.msra.mxu0 0.0
    %157 = vmatprep.subr.mxu0 0.0
    %158 = vmatpush1.msra.mxu0 0.0
    %159 = vmatprep.subr.mxu0 0.0
    %160 = vmatpush1.msra.mxu0 0.0
    %161 = vmatprep.subr.mxu0 0.0
    %162 = vmatpush1.msra.mxu0 0.0
    %163 = vmatprep.subr.mxu0 0.0
    %164 = vmatpush1.msra.mxu0 0.0
    %165 = vmatprep.subr.mxu0 0.0
    %166 = vmatpush1.msra.mxu0 0.0
    %167 = vmatprep.subr.mxu0 0.0
    %168 = vmatpush1.msra.mxu0 0.0
    %169 = vmatprep.mubr.f32.mxu0 0.0
    %170 = vmatmul.mubr.f32.gmra.mrb[0].mxu0 %v60
    %v171 = vpop.f32.mrb[0].mxu0
    %v172 = vadd.f32 %v98, %v171
    %v173 = vpop.f32.mrb[0].mxu0
    %v174 = vadd.f32 %v102, %v173
    %175 = vdwg.mxu0
    %v176 = vmax.f32 %v172, 0.0
    %v177 = vmax.f32 %v174, 0.0
    %v178 = vld [vmem:[#allocation7] sm:$0xff]
    %v179 = vld [vmem:[#allocation7 + $0x8] sm:$0xff]
    %v180 = vld [vmem:[#allocation7 + $0x10] sm:$0xff]
    %v181 = vld [vmem:[#allocation7 + $0x18] sm:$0xff]
    %v182 = vld [vmem:[#allocation7 + $0x20] sm:$0xff]
    %v183 = vld [vmem:[#allocation7 + $0x28] sm:$0xff]
    %v184 = vld [vmem:[#allocation7 + $0x30] sm:$0xff]
    %v185 = vld [vmem:[#allocation7 + $0x38] sm:$0xff]
    %v186 = vld [vmem:[#allocation7 + $0x40] sm:$0xff]
    %v187 = vld [vmem:[#allocation7 + $0x48] sm:$0xff]
    %v188 = vld [vmem:[#allocation7 + $0x50] sm:$0xff]
    %v189 = vld [vmem:[#allocation7 + $0x58] sm:$0xff]
    %v190 = vld [vmem:[#allocation7 + $0x60] sm:$0xff]
    %v191 = vld [vmem:[#allocation7 + $0x68] sm:$0xff]
    %v192 = vld [vmem:[#allocation7 + $0x70] sm:$0xff]
    %v193 = vld [vmem:[#allocation7 + $0x78] sm:$0xff]
    %v194 = vld [vmem:[#allocation7 + $0x80] sm:$0xff]
    %v195 = vld [vmem:[#allocation7 + $0x88] sm:$0xff]
    %v196 = vld [vmem:[#allocation7 + $0x90] sm:$0xff]
    %v197 = vld [vmem:[#allocation7 + $0x98] sm:$0xff]
    %v198 = vld [vmem:[#allocation7 + $0xa0] sm:$0xff]
    %v199 = vld [vmem:[#allocation7 + $0xa8] sm:$0xff]
    %v200 = vld [vmem:[#allocation7 + $0xb0] sm:$0xff]
    %v201 = vld [vmem:[#allocation7 + $0xb8] sm:$0xff]
    %v202 = vld [vmem:[#allocation7 + $0xc0] sm:$0xff]
    %v203 = vld [vmem:[#allocation7 + $0xc8] sm:$0xff]
    %v204 = vld [vmem:[#allocation7 + $0xd0] sm:$0xff]
    %v205 = vld [vmem:[#allocation7 + $0xd8] sm:$0xff]
    %v206 = vld [vmem:[#allocation7 + $0xe0] sm:$0xff]
    %v207 = vld [vmem:[#allocation7 + $0xe8] sm:$0xff]
    %v208 = vld [vmem:[#allocation7 + $0xf0] sm:$0xff]
    %v209 = vld [vmem:[#allocation7 + $0xf8] sm:$0xff]
    %v210 = vld [vmem:[%s4] sm:$0x1]
    %v212 = vlaneseq
    %v213 = vshrl.u32 %v212, 7
    %v214 = vsub.s32 0, %v213
    %v215 = vrot.slane %v210, %v214
    %217 = vmatprep.subr.mxu0 0.0
    %218 = vmatpush1.msra.mxu0 %v178
    %219 = vmatprep.subr.mxu0 0.0
    %220 = vmatpush1.msra.mxu0 %v179
    %221 = vmatprep.subr.mxu0 0.0
    %222 = vmatpush1.msra.mxu0 %v180
    %223 = vmatprep.subr.mxu0 0.0
    %224 = vmatpush1.msra.mxu0 %v181
    %225 = vmatprep.subr.mxu0 0.0
    %226 = vmatpush1.msra.mxu0 %v182
    %227 = vmatprep.subr.mxu0 0.0
    %228 = vmatpush1.msra.mxu0 %v183
    %229 = vmatprep.subr.mxu0 0.0
    %230 = vmatpush1.msra.mxu0 %v184
    %231 = vmatprep.subr.mxu0 0.0
    %232 = vmatpush1.msra.mxu0 %v185
    %233 = vmatprep.subr.mxu0 0.0
    %234 = vmatpush1.msra.mxu0 %v186
    %235 = vmatprep.subr.mxu0 0.0
    %236 = vmatpush1.msra.mxu0 %v187
    %237 = vmatprep.subr.mxu0 0.0
    %238 = vmatpush1.msra.mxu0 %v188
    %239 = vmatprep.subr.mxu0 0.0
    %240 = vmatpush1.msra.mxu0 %v189
    %241 = vmatprep.subr.mxu0 0.0
    %242 = vmatpush1.msra.mxu0 %v190
    %243 = vmatprep.subr.mxu0 0.0
    %244 = vmatpush1.msra.mxu0 %v191
    %245 = vmatprep.subr.mxu0 0.0
    %246 = vmatpush1.msra.mxu0 %v192
    %247 = vmatprep.subr.mxu0 0.0
    %248 = vmatpush1.msra.mxu0 %v193
    %249 = vmatprep.subr.mxu0 0.0
    %250 = vmatpush1.msra.mxu0 %v194
    %251 = vmatprep.subr.mxu0 0.0
    %252 = vmatpush1.msra.mxu0 %v195
    %253 = vmatprep.subr.mxu0 0.0
    %254 = vmatpush1.msra.mxu0 %v196
    %255 = vmatprep.subr.mxu0 0.0
    %256 = vmatpush1.msra.mxu0 %v197
    %257 = vmatprep.subr.mxu0 0.0
    %258 = vmatpush1.msra.mxu0 %v198
    %259 = vmatprep.subr.mxu0 0.0
    %260 = vmatpush1.msra.mxu0 %v199
    %261 = vmatprep.subr.mxu0 0.0
    %262 = vmatpush1.msra.mxu0 %v200
    %263 = vmatprep.subr.mxu0 0.0
    %264 = vmatpush1.msra.mxu0 %v201
    %265 = vmatprep.subr.mxu0 0.0
    %266 = vmatpush1.msra.mxu0 %v202
    %267 = vmatprep.subr.mxu0 0.0
    %268 = vmatpush1.msra.mxu0 %v203
    %269 = vmatprep.subr.mxu0 0.0
    %270 = vmatpush1.msra.mxu0 %v204
    %271 = vmatprep.subr.mxu0 0.0
    %272 = vmatpush1.msra.mxu0 %v205
    %273 = vmatprep.subr.mxu0 0.0
    %274 = vmatpush1.msra.mxu0 %v206
    %275 = vmatprep.subr.mxu0 0.0
    %276 = vmatpush1.msra.mxu0 %v207
    %277 = vmatprep.subr.mxu0 0.0
    %278 = vmatpush1.msra.mxu0 %v208
    %279 = vmatprep.subr.mxu0 0.0
    %280 = vmatpush1.msra.mxu0 %v209
    %281 = vmatprep.mubr.f32.mxu0 %v177
    %282 = vmatmul.mubr.f32.gmra.mrb[0].mxu0 %v176
    %v283 = vpop.f32.mrb[0].mxu0
    %v284 = vadd.f32 %v215, %v283
    %v285 = vpop.f32.mrb[0].mxu0
    %286 = vdwg.mxu0
    %v287 = vxor.u32 %v284, 2147483648
    %v288 = vmul.f32 %v287, 1.442695
    %v289 = vpow.pop %v288
    %v290 = vadd.f32 %v289, 1.0
    %v291 = vrcp.pop %v290
    %v292 = vmul.f32 1.0, %v291
    %293 = vst [vmem:[#allocation8] sm:$0xff] %v292
    // Predicated region
    $region34: #{tpu_custom_call.1} parent=1 // pred_check
      _
    $region35: #{tpu_custom_call.1} parent=1 // pred_check_branch
      %295 = sbr.rel (0) target = $region37
    $region36: #{tpu_custom_call.1} parent=1 // pred_region
      %s297 = ssub.s32 128, 128
      %298 = vsyncadd [#allocation4], %s297
      %s300 = sshll.u32 [#allocation8], 4
      %s301 = int_to_ptr.vmem [resolvable:$true] %s300
      %303 = dma.vmem_to_hbm [thread:$0]  %s301, 128, %s5, [#allocation4]
    $region37: #{tpu_custom_call.1} parent=1 // pred_fallthru
      _
    // Predicated region
    $region38: #{tpu_custom_call.1} parent=1 // pred_check
      _
    $region39: #{tpu_custom_call.1} parent=1 // pred_check_branch
      %305 = sbr.rel (0) target = $region41
    $region40: #{tpu_custom_call.1} parent=1 // pred_region
      %306 = dma.done [#allocation4], 128
    $region41: #{tpu_custom_call.1} parent=1 // pred_fallthru
      _
    %307 = vsyncpa [#allocation3], 1
    %308 = vsyncpa [#allocation6], 1
    %309 = vsyncpa [#allocation4], 1

</llo_original>
